<compile_context>
chip_gen: v7x
topology: tpu7x:2x2x1
jax: 0.10.0
libtpu: 0.0.40
codegen_flags: <defaults>
</compile_context>

<pallas_src>
import functools

import jax
import jax.numpy as jnp
import numpy as np
from jax import lax
from jax.experimental import pallas as pl
from jax.experimental.pallas import tpu as pltpu

EPS = 1e-5                      # torch.nn.BatchNorm2d default eps
_VMEM_LIMIT = 32 * 1024 * 1024  # safe on v5e/v6e/v7x; demo footprint << limit


# ----------------------------------------------------------------------------
# Fused kernel: ReLU -> depthwise 3x3 (dilated) -> BN -> pointwise 1x1 -> BN
#               [-> + skip (1x1 conv -> BN, or identity) residual add]
# ----------------------------------------------------------------------------
def _fused_sepconv_kernel(xp_ref, dwk_ref, wpw_ref, bias_ref, *rest,
                          TH, W, dil, apply_relu, skip_mode, skip_relu):
    if skip_mode == "conv":
        inp_ref, wsk_ref, o_ref = rest
    elif skip_mode == "identity":
        inp_ref, o_ref = rest
    else:
        (o_ref,) = rest

    cin = xp_ref.shape[-1]
    cout = wpw_ref.shape[-1]

    # top row (in the padded image) of this output row-tile
    row0 = pl.multiple_of(pl.program_id(1) * TH, TH)

    # one halo load: (TH + 2*dil, W + 2*dil, cin); ReLU(0) == 0 so applying the
    # preceding ReLU on the padded tile is equivalent to relu-then-pad.
    xp = xp_ref[0, pl.ds(row0, TH + 2 * dil), :, :]
    if apply_relu:
        xp = jnp.maximum(xp, 0.0)

    # depthwise 3x3 dilated conv (VPU, f32); BN scale already folded into dwk
    dwk = dwk_ref[...]                              # (3, 3, cin)
    acc = jnp.zeros((TH, W, cin), jnp.float32)
    for dy in range(3):
        for dx in range(3):
            patch = xp[dy * dil:dy * dil + TH, dx * dil:dx * dil + W, :]
            acc = acc + patch * dwk[dy, dx][None, None, :]

    # pointwise 1x1 conv: one big MXU matmul, bf16 operands, f32 accumulation
    y = jnp.dot(acc.reshape(TH * W, cin).astype(jnp.bfloat16), wpw_ref[...],
                preferred_element_type=jnp.float32)
    y = y + bias_ref[...]                           # folded BN biases (1, cout)

    if skip_mode != "none":
        sk = inp_ref[0]                             # (TH, W, cin_in) f32
        if skip_relu:                               # in-place-ReLU quirk of the module
            sk = jnp.maximum(sk, 0.0)
        if skip_mode == "conv":
            sk2 = jnp.dot(sk.reshape(TH * W, sk.shape[-1]).astype(jnp.bfloat16),
                          wsk_ref[...], preferred_element_type=jnp.float32)
        else:                                       # identity skip
            sk2 = sk.reshape(TH * W, cout)
        y = y + sk2

    o_ref[0] = y.reshape(TH, W, cout)


def fused_sepconv(x, dwk, wpw_bf16, bias, *, dil, TH, apply_relu,
                  skip_mode="none", skip_relu=False, inp=None, wskip_bf16=None):
    """x: (N,H,W,Cin) f32 NHWC.  Returns (N,H,W,Cout) f32."""
    N, H, W, Cin = x.shape
    Cout = wpw_bf16.shape[-1]
    assert H % TH == 0
    R = H // TH

    # fixed_padding(kernel=3, dilation=d) == symmetric pad of d on each side
    xp = jnp.pad(x, ((0, 0), (dil, dil), (dil, dil), (0, 0)))
    Hp, Wp = H + 2 * dil, W + 2 * dil

    in_specs = [
        pl.BlockSpec((1, Hp, Wp, Cin), lambda n, i: (n, 0, 0, 0)),   # resident per n
        pl.BlockSpec((3, 3, Cin), lambda n, i: (0, 0, 0)),
        pl.BlockSpec((Cin, Cout), lambda n, i: (0, 0)),
        pl.BlockSpec((1, Cout), lambda n, i: (0, 0)),
    ]
    args = [xp, dwk, wpw_bf16, bias]
    if skip_mode != "none":
        CinI = inp.shape[-1]
        if skip_mode == "identity":
            assert CinI == Cout
        in_specs.append(pl.BlockSpec((1, TH, W, CinI), lambda n, i: (n, i, 0, 0)))
        args.append(inp)
    if skip_mode == "conv":
        in_specs.append(pl.BlockSpec((wskip_bf16.shape[0], Cout), lambda n, i: (0, 0)))
        args.append(wskip_bf16)

    kernel = functools.partial(_fused_sepconv_kernel, TH=TH, W=W, dil=dil,
                               apply_relu=apply_relu, skip_mode=skip_mode,
                               skip_relu=skip_relu)
    return pl.pallas_call(
        kernel,
        out_shape=jax.ShapeDtypeStruct((N, H, W, Cout), jnp.float32),
        grid_spec=pltpu.PrefetchScalarGridSpec(
            num_scalar_prefetch=0,
            grid=(N, R),
            in_specs=in_specs,
            out_specs=pl.BlockSpec((1, TH, W, Cout), lambda n, i: (n, i, 0, 0)),
        ),
        compiler_params=pltpu.CompilerParams(
            dimension_semantics=("parallel", "parallel"),
            vmem_limit_bytes=_VMEM_LIMIT),
    )(*args)


# ----------------------------------------------------------------------------
# Block forward (NCHW in / NCHW out; Pallas kernels run in NHWC)
# ----------------------------------------------------------------------------
def block_forward(x_nchw, params):
    x = jnp.transpose(x_nchw, (0, 2, 3, 1)).astype(jnp.float32)   # -> NHWC
    inp = x
    H = x.shape[1]
    TH = 8 if (H % 8 == 0 and H > 8) else H    # row tile: TH*W >= 128 rows per matmul

    units = params["units"]
    skip_mode = params["skip_mode"]
    for u, up in enumerate(units):
        last = (u == len(units) - 1)
        if last:
            bias = up["bias"]
            if skip_mode == "conv":
                bias = bias + params["skip_bias"]
            x = fused_sepconv(x, up["dwk"], up["wpw_bf16"], bias,
                              dil=up["dil"], TH=TH, apply_relu=up["apply_relu"],
                              skip_mode=skip_mode,
                              skip_relu=params["skip_sees_relu"],
                              inp=inp, wskip_bf16=params.get("wskip_bf16"))
        else:
            x = fused_sepconv(x, up["dwk"], up["wpw_bf16"], up["bias"],
                              dil=up["dil"], TH=TH, apply_relu=up["apply_relu"])
    return jnp.transpose(x, (0, 3, 1, 2))                          # -> NCHW


# ----------------------------------------------------------------------------
# Deterministic parameter init mirroring the module constructor (stride == 1)
# ----------------------------------------------------------------------------
def init_block_params(key, inplanes, planes, reps, *, dilation=1, stride=1,
                      start_with_relu=True, grow_first=True, is_last=False):
    assert stride == 1  # TODO(synk): stride != 1 not implemented

    cfg = []                                   # (in_ch, out_ch, dilation) per unit
    filters = inplanes
    if grow_first:
        cfg.append((inplanes, planes, dilation))
        filters = planes
    for _ in range(reps - 1):
        cfg.append((filters, filters, dilation))
    if not grow_first:
        cfg.append((inplanes, planes, dilation))
    if is_last:
        cfg.append((planes, planes, 1))

    def bn_fold(c):        # eval-mode BN with fresh buffers: y = x / sqrt(1 + eps)
        gamma = jnp.ones((c,), jnp.float32)
        beta = jnp.zeros((c,), jnp.float32)
        mean = jnp.zeros((c,), jnp.float32)
        var = jnp.ones((c,), jnp.float32)
        s = gamma / jnp.sqrt(var + EPS)
        return s, beta - mean * s

    keys = jax.random.split(key, 2 * len(cfg) + 1)
    units = []
    for u, (cin, cout, dil) in enumerate(cfg):
        kd, kp = keys[2 * u], keys[2 * u + 1]
        dw = jax.random.normal(kd, (3, 3, cin), jnp.float32) * float(np.sqrt(2.0 / 9.0))
        pw = jax.random.normal(kp, (cin, cout), jnp.float32) * float(np.sqrt(2.0 / cin))
        s_dw, b_dw = bn_fold(cin)         # SeparableConv2d.bn   (over in channels)
        s_out, b_out = bn_fold(cout)      # trailing BatchNorm(planes)
        dwk = dw * s_dw[None, None, :]                      # fold dw-BN scale
        wpw = pw * s_out[None, :]                           # fold out-BN scale
        bias = (b_dw @ wpw + b_out)[None, :]                # fold dw-BN bias through pw
        units.append(dict(dwk=dwk, wpw_bf16=wpw.astype(jnp.bfloat16), bias=bias,
                          dil=dil, apply_relu=(True if u > 0 else start_with_relu)))

    params = dict(units=units)
    if planes != inplanes or stride != 1:
        wsk = jax.random.normal(keys[-1], (inplanes, planes), jnp.float32) \
            * float(np.sqrt(2.0 / inplanes))
        s_sk, b_sk = bn_fold(planes)
        wsk_f = wsk * s_sk[None, :]
        params.update(skip_mode="conv",
                      wskip_bf16=wsk_f.astype(jnp.bfloat16),
                      skip_bias=b_sk[None, :])
    else:
        params.update(skip_mode="identity")
    # nn.ReLU(inplace=True) at the head of `rep` mutates the block input in place,
    # so the skip branch sees relu(inp) whenever start_with_relu is True.
    params["skip_sees_relu"] = bool(start_with_relu)
    return params


# ----------------------------------------------------------------------------
# Pure-JAX reference (lax.conv for depthwise, plain dot for pointwise) using the
# same folded weights and the same bf16-operand / f32-accumulation matmul policy.
# ----------------------------------------------------------------------------
def ref_block_forward(x_nchw, params):
    x = jnp.transpose(x_nchw, (0, 2, 3, 1)).astype(jnp.float32)
    inp = x
    for up in params["units"]:
        if up["apply_relu"]:
            x = jnp.maximum(x, 0.0)
        N, H, W, cin = x.shape
        d = up["dil"]
        x = lax.conv_general_dilated(
            x, up["dwk"].reshape(3, 3, 1, cin), window_strides=(1, 1),
            padding=[(d, d), (d, d)], rhs_dilation=(d, d),
            dimension_numbers=("NHWC", "HWIO", "NHWC"),
            feature_group_count=cin, precision=lax.Precision.HIGHEST)
        y = jnp.dot(x.reshape(-1, cin).astype(jnp.bfloat16), up["wpw_bf16"],
                    preferred_element_type=jnp.float32)
        x = y.reshape(N, H, W, -1) + up["bias"]

    si = jnp.maximum(inp, 0.0) if params["skip_sees_relu"] else inp
    if params["skip_mode"] == "conv":
        N, H, W, cin = si.shape
        sk = jnp.dot(si.reshape(-1, cin).astype(jnp.bfloat16), params["wskip_bf16"],
                     preferred_element_type=jnp.float32)
        sk = sk.reshape(N, H, W, -1) + params["skip_bias"]
    else:
        sk = si
    return jnp.transpose(x + sk, (0, 3, 1, 2))


if __name__ == "__main__":
    key = jax.random.PRNGKey(0)
    k_x, k_p = jax.random.split(key)

    # Small Block config: Block(inplanes=64, planes=128, reps=2, stride=1,
    #                           dilation=2, start_with_relu=True, grow_first=True)
    # planes=128 keeps every output lane-dense (last dim multiple of 128).
    N, inplanes, planes, H, W = 2, 64, 128, 16, 16
    x = jax.random.normal(k_x, (N, inplanes, H, W), jnp.float32)    # NCHW input
    params = init_block_params(k_p, inplanes, planes, reps=2, dilation=2,
                               stride=1, start_with_relu=True, grow_first=True,
                               is_last=False)

    out = jax.block_until_ready(block_forward(x, params))
    assert out.shape == (N, planes, H, W), out.shape

    ref = jax.block_until_ready(ref_block_forward(x, params))
    np.testing.assert_allclose(np.asarray(out), np.asarray(ref), rtol=1e-2, atol=1e-2)

    print("KERNEL_OK")
</pallas_src>

<mosaic_0001>
module attributes {stable_mosaic.version = 11 : i64} {
  func.func @_fused_sepconv_kernel(%arg0: i32, %arg1: i32, %arg2: memref<1x20x20x64xf32, #tpu.memory_space<vmem>>, %arg3: memref<3x3x64xf32, #tpu.memory_space<vmem>>, %arg4: memref<64x128xbf16, #tpu.memory_space<vmem>>, %arg5: memref<1x128xf32, #tpu.memory_space<vmem>>, %arg6: memref<1x8x16x128xf32, #tpu.memory_space<vmem>>) attributes {dimension_semantics = [#tpu.dimension_semantics<parallel>, #tpu.dimension_semantics<parallel>], iteration_bounds = array<i64: 2, 2>, scalar_prefetch = 0 : i64, scratch_operands = 0 : i64, tpu.core_type = #tpu.core_type<tc>, window_params = [{transform_indices = @transform_0, window_bounds = array<i64: 1, 20, 20, 64>}, {pipeline_mode = #tpu.pipeline_mode<synchronous>, transform_indices = @transform_1, window_bounds = array<i64: 3, 3, 64>}, {pipeline_mode = #tpu.pipeline_mode<synchronous>, transform_indices = @transform_2, window_bounds = array<i64: 64, 128>}, {pipeline_mode = #tpu.pipeline_mode<synchronous>, transform_indices = @transform_3, window_bounds = array<i64: 1, 128>}, {transform_indices = @transform_4, window_bounds = array<i64: 1, 8, 16, 128>}]} {
    %c8_i32 = arith.constant 8 : i32
    %0 = arith.muli %arg1, %c8_i32 : i32
    %1 = tpu.assume_multiple %0, 8 : i32
    %c0 = arith.constant 0 : index
    %2 = arith.index_cast %1 : i32 to index
    %c0_0 = arith.constant 0 : index
    %c0_1 = arith.constant 0 : index
    %3 = vector.load %arg2[%c0, %2, %c0_0, %c0_1] : memref<1x20x20x64xf32, #tpu.memory_space<vmem>>, vector<1x12x20x64xf32>
    %4 = vector.shape_cast %3 : vector<1x12x20x64xf32> to vector<12x20x64xf32>
    %cst = arith.constant 0.000000e+00 : f32
    %5 = vector.broadcast %cst : f32 to vector<12x20x64xf32>
    %6 = arith.maximumf %4, %5 : vector<12x20x64xf32>
    %c0_2 = arith.constant 0 : index
    %c0_3 = arith.constant 0 : index
    %c0_4 = arith.constant 0 : index
    %7 = vector.load %arg3[%c0_2, %c0_3, %c0_4] : memref<3x3x64xf32, #tpu.memory_space<vmem>>, vector<3x3x64xf32>
    %cst_5 = arith.constant 0.000000e+00 : f32
    %8 = vector.broadcast %cst_5 : f32 to vector<8x16x64xf32>
    %9 = vector.extract_strided_slice %6 {offsets = [0, 0, 0], sizes = [8, 16, 64], strides = [1, 1, 1]} : vector<12x20x64xf32> to vector<8x16x64xf32>
    %10 = vector.extract_strided_slice %7 {offsets = [0, 0, 0], sizes = [1, 1, 64], strides = [1, 1, 1]} : vector<3x3x64xf32> to vector<1x1x64xf32>
    %11 = vector.shape_cast %10 : vector<1x1x64xf32> to vector<64xf32>
    %12 = vector.shape_cast %11 : vector<64xf32> to vector<1x1x64xf32>
    %13 = vector.broadcast %12 : vector<1x1x64xf32> to vector<8x16x64xf32>
    %14 = arith.mulf %9, %13 : vector<8x16x64xf32>
    %15 = arith.addf %8, %14 : vector<8x16x64xf32>
    %16 = vector.extract_strided_slice %6 {offsets = [0, 2, 0], sizes = [8, 16, 64], strides = [1, 1, 1]} : vector<12x20x64xf32> to vector<8x16x64xf32>
    %17 = vector.extract_strided_slice %7 {offsets = [0, 1, 0], sizes = [1, 1, 64], strides = [1, 1, 1]} : vector<3x3x64xf32> to vector<1x1x64xf32>
    %18 = vector.shape_cast %17 : vector<1x1x64xf32> to vector<64xf32>
    %19 = vector.shape_cast %18 : vector<64xf32> to vector<1x1x64xf32>
    %20 = vector.broadcast %19 : vector<1x1x64xf32> to vector<8x16x64xf32>
    %21 = arith.mulf %16, %20 : vector<8x16x64xf32>
    %22 = arith.addf %15, %21 : vector<8x16x64xf32>
    %23 = vector.extract_strided_slice %6 {offsets = [0, 4, 0], sizes = [8, 16, 64], strides = [1, 1, 1]} : vector<12x20x64xf32> to vector<8x16x64xf32>
    %24 = vector.extract_strided_slice %7 {offsets = [0, 2, 0], sizes = [1, 1, 64], strides = [1, 1, 1]} : vector<3x3x64xf32> to vector<1x1x64xf32>
    %25 = vector.shape_cast %24 : vector<1x1x64xf32> to vector<64xf32>
    %26 = vector.shape_cast %25 : vector<64xf32> to vector<1x1x64xf32>
    %27 = vector.broadcast %26 : vector<1x1x64xf32> to vector<8x16x64xf32>
    %28 = arith.mulf %23, %27 : vector<8x16x64xf32>
    %29 = arith.addf %22, %28 : vector<8x16x64xf32>
    %30 = vector.extract_strided_slice %6 {offsets = [2, 0, 0], sizes = [8, 16, 64], strides = [1, 1, 1]} : vector<12x20x64xf32> to vector<8x16x64xf32>
    %31 = vector.extract_strided_slice %7 {offsets = [1, 0, 0], sizes = [1, 1, 64], strides = [1, 1, 1]} : vector<3x3x64xf32> to vector<1x1x64xf32>
    %32 = vector.shape_cast %31 : vector<1x1x64xf32> to vector<64xf32>
    %33 = vector.shape_cast %32 : vector<64xf32> to vector<1x1x64xf32>
    %34 = vector.broadcast %33 : vector<1x1x64xf32> to vector<8x16x64xf32>
    %35 = arith.mulf %30, %34 : vector<8x16x64xf32>
    %36 = arith.addf %29, %35 : vector<8x16x64xf32>
    %37 = vector.extract_strided_slice %6 {offsets = [2, 2, 0], sizes = [8, 16, 64], strides = [1, 1, 1]} : vector<12x20x64xf32> to vector<8x16x64xf32>
    %38 = vector.extract_strided_slice %7 {offsets = [1, 1, 0], sizes = [1, 1, 64], strides = [1, 1, 1]} : vector<3x3x64xf32> to vector<1x1x64xf32>
    %39 = vector.shape_cast %38 : vector<1x1x64xf32> to vector<64xf32>
    %40 = vector.shape_cast %39 : vector<64xf32> to vector<1x1x64xf32>
    %41 = vector.broadcast %40 : vector<1x1x64xf32> to vector<8x16x64xf32>
    %42 = arith.mulf %37, %41 : vector<8x16x64xf32>
    %43 = arith.addf %36, %42 : vector<8x16x64xf32>
    %44 = vector.extract_strided_slice %6 {offsets = [2, 4, 0], sizes = [8, 16, 64], strides = [1, 1, 1]} : vector<12x20x64xf32> to vector<8x16x64xf32>
    %45 = vector.extract_strided_slice %7 {offsets = [1, 2, 0], sizes = [1, 1, 64], strides = [1, 1, 1]} : vector<3x3x64xf32> to vector<1x1x64xf32>
    %46 = vector.shape_cast %45 : vector<1x1x64xf32> to vector<64xf32>
    %47 = vector.shape_cast %46 : vector<64xf32> to vector<1x1x64xf32>
    %48 = vector.broadcast %47 : vector<1x1x64xf32> to vector<8x16x64xf32>
    %49 = arith.mulf %44, %48 : vector<8x16x64xf32>
    %50 = arith.addf %43, %49 : vector<8x16x64xf32>
    %51 = vector.extract_strided_slice %6 {offsets = [4, 0, 0], sizes = [8, 16, 64], strides = [1, 1, 1]} : vector<12x20x64xf32> to vector<8x16x64xf32>
    %52 = vector.extract_strided_slice %7 {offsets = [2, 0, 0], sizes = [1, 1, 64], strides = [1, 1, 1]} : vector<3x3x64xf32> to vector<1x1x64xf32>
    %53 = vector.shape_cast %52 : vector<1x1x64xf32> to vector<64xf32>
    %54 = vector.shape_cast %53 : vector<64xf32> to vector<1x1x64xf32>
    %55 = vector.broadcast %54 : vector<1x1x64xf32> to vector<8x16x64xf32>
    %56 = arith.mulf %51, %55 : vector<8x16x64xf32>
    %57 = arith.addf %50, %56 : vector<8x16x64xf32>
    %58 = vector.extract_strided_slice %6 {offsets = [4, 2, 0], sizes = [8, 16, 64], strides = [1, 1, 1]} : vector<12x20x64xf32> to vector<8x16x64xf32>
    %59 = vector.extract_strided_slice %7 {offsets = [2, 1, 0], sizes = [1, 1, 64], strides = [1, 1, 1]} : vector<3x3x64xf32> to vector<1x1x64xf32>
    %60 = vector.shape_cast %59 : vector<1x1x64xf32> to vector<64xf32>
    %61 = vector.shape_cast %60 : vector<64xf32> to vector<1x1x64xf32>
    %62 = vector.broadcast %61 : vector<1x1x64xf32> to vector<8x16x64xf32>
    %63 = arith.mulf %58, %62 : vector<8x16x64xf32>
    %64 = arith.addf %57, %63 : vector<8x16x64xf32>
    %65 = vector.extract_strided_slice %6 {offsets = [4, 4, 0], sizes = [8, 16, 64], strides = [1, 1, 1]} : vector<12x20x64xf32> to vector<8x16x64xf32>
    %66 = vector.extract_strided_slice %7 {offsets = [2, 2, 0], sizes = [1, 1, 64], strides = [1, 1, 1]} : vector<3x3x64xf32> to vector<1x1x64xf32>
    %67 = vector.shape_cast %66 : vector<1x1x64xf32> to vector<64xf32>
    %68 = vector.shape_cast %67 : vector<64xf32> to vector<1x1x64xf32>
    %69 = vector.broadcast %68 : vector<1x1x64xf32> to vector<8x16x64xf32>
    %70 = arith.mulf %65, %69 : vector<8x16x64xf32>
    %71 = arith.addf %64, %70 : vector<8x16x64xf32>
    %72 = vector.shape_cast %71 : vector<8x16x64xf32> to vector<128x64xf32>
    %73 = arith.truncf %72 : vector<128x64xf32> to vector<128x64xbf16>
    %c0_6 = arith.constant 0 : index
    %c0_7 = arith.constant 0 : index
    %74 = vector.load %arg4[%c0_6, %c0_7] : memref<64x128xbf16, #tpu.memory_space<vmem>>, vector<64x128xbf16>
    %cst_8 = arith.constant dense<0.000000e+00> : vector<128x128xf32>
    %75 = tpu.matmul %73, %74, %cst_8 {dimension_numbers = #tpu.dot_dimension_numbers<[1], [0], [0], [1], [0, 0, 1, 1], [], []>} : vector<128x64xbf16>, vector<64x128xbf16>, vector<128x128xf32> -> vector<128x128xf32>
    %c0_9 = arith.constant 0 : index
    %c0_10 = arith.constant 0 : index
    %76 = vector.load %arg5[%c0_9, %c0_10] : memref<1x128xf32, #tpu.memory_space<vmem>>, vector<1x128xf32>
    %77 = vector.broadcast %76 : vector<1x128xf32> to vector<128x128xf32>
    %78 = arith.addf %75, %77 : vector<128x128xf32>
    %79 = vector.shape_cast %78 : vector<128x128xf32> to vector<8x16x128xf32>
    %c0_11 = arith.constant 0 : index
    %c0_12 = arith.constant 0 : index
    %c0_13 = arith.constant 0 : index
    %c0_14 = arith.constant 0 : index
    %80 = vector.load %arg6[%c0_11, %c0_12, %c0_13, %c0_14] : memref<1x8x16x128xf32, #tpu.memory_space<vmem>>, vector<1x8x16x128xf32>
    %81 = vector.shape_cast %80 : vector<1x8x16x128xf32> to vector<8x16x128xf32>
    %82 = vector.shape_cast %79 : vector<8x16x128xf32> to vector<1x8x16x128xf32>
    tpu.vector_store %arg6[%c0_11, %c0_12, %c0_13, %c0_14], %82 {strides = array<i32>} : memref<1x8x16x128xf32, #tpu.memory_space<vmem>>, vector<1x8x16x128xf32>,
    return
  }
  func.func @transform_0(%arg0: i32, %arg1: i32) -> (i32, i32, i32, i32) {
    %c0_i32 = arith.constant 0 : i32
    %c0_i32_0 = arith.constant 0 : i32
    %c0_i32_1 = arith.constant 0 : i32
    %c0_i32_2 = arith.constant 0 : i32
    return %arg0, %c0_i32, %c0_i32_0, %c0_i32_1 : i32, i32, i32, i32
  }
  func.func @transform_1(%arg0: i32, %arg1: i32) -> (i32, i32, i32) {
    %c0_i32 = arith.constant 0 : i32
    %c0_i32_0 = arith.constant 0 : i32
    %c0_i32_1 = arith.constant 0 : i32
    %c0_i32_2 = arith.constant 0 : i32
    return %c0_i32, %c0_i32_0, %c0_i32_1 : i32, i32, i32
  }
  func.func @transform_2(%arg0: i32, %arg1: i32) -> (i32, i32) {
    %c0_i32 = arith.constant 0 : i32
    %c0_i32_0 = arith.constant 0 : i32
    %c0_i32_1 = arith.constant 0 : i32
    return %c0_i32, %c0_i32_0 : i32, i32
  }
  func.func @transform_3(%arg0: i32, %arg1: i32) -> (i32, i32) {
    %c0_i32 = arith.constant 0 : i32
    %c0_i32_0 = arith.constant 0 : i32
    %c0_i32_1 = arith.constant 0 : i32
    return %c0_i32, %c0_i32_0 : i32, i32
  }
  func.func @transform_4(%arg0: i32, %arg1: i32) -> (i32, i32, i32, i32) {
    %c0_i32 = arith.constant 0 : i32
    %c0_i32_0 = arith.constant 0 : i32
    %c0_i32_1 = arith.constant 0 : i32
    return %arg0, %arg1, %c0_i32, %c0_i32_0 : i32, i32, i32, i32
  }
}

</mosaic_0001>

<llo_original>
// kernel: tpu_custom_call.1
$region0: #{tpu_custom_call.1}
  #allocation0 [shape = 'u32[]', space=smem, size = 0x4, offset = 0x4, fixed_abs, tag = 'smem constant byte address 0x4 - core index']
  #allocation1 [shape = 'u32[144,128]{1,0:T(1,128)}', space=vmem, size = 0x12000, scoped, tag = 'internal scratch']
  %s0 = inlined_call_operand.vmem [shape: f32[2,20,20,64], index: 0, kind: input, shape index: {}]
  %s1 = inlined_call_operand.vmem [shape: f32[3,3,64], index: 1, kind: input, shape index: {}]
  %s2 = inlined_call_operand.vmem [shape: bf16[64,128], index: 2, kind: input, shape index: {}]
  %s3 = inlined_call_operand.vmem [shape: f32[1,128], index: 3, kind: input, shape index: {}]
  %s4 = inlined_call_operand.hbm [shape: f32[2,16,16,128], index: 4, kind: output, shape index: {}]
  %s5 = sld [smem:[#allocation0]]
  $region49: #{tpu_custom_call.1} parent=0
    _
  %s7 = ssub.s32 1, %s5
  %s8 = scalar_select 0, %s7, %s5
  $region1: #{tpu_custom_call.1} parent=0
    #allocation2 [shape = 'u8[131072]{0}', space=vmem, size = 0x20000, scoped, tag = 'output window, operand 0']
    #allocation3 [shape = 's32[2]{0}', space=sflag, size = 0x8, scoped, tag = 'scoped memory for tpu_custom_call.1']
    %9 = vsyncpa [#allocation3], 0
    %s10 = scalar_lea.sflag [#allocation3], 1
    %11 = vsyncpa %s10, 0
    loop: start=0, step=1, limit=6
    $region2: #{tpu_custom_call.1} parent=1 // loop_pre_header
      _
    $region3: #{tpu_custom_call.1} parent=1 // loop_header
      %s13 = sphi 0, %s17
      %p14 = scmp.ge.s32.totalorder %s13, 6
      %s20 = sphi 0, %s32
      %s21 = sphi 0, %s28
      %s22 = sphi 0, %s20
      %s23 = sphi 0, %s21
      %s24 = sphi 0, %s22
      %s25 = sphi 0, %s23
      %s35 = sphi 0, %s37
      %s38 = sphi 0, %s35
      %s39 = sphi 0, %s38
      %s55 = sphi 0, %s39
      %s59 = sphi 0, %s59
      %s61 = sphi 0, %s59
      %s62 = sphi 0, %s61
      %s76 = sphi 0, %s62
      %s80 = sphi 0, %s80
      %s82 = sphi 0, %s80
      %s83 = sphi 0, %s82
      %s97 = sphi 0, %s83
      %s101 = sphi 0, %s101
      %s103 = sphi 0, %s101
      %s104 = sphi 0, %s103
      %s118 = sphi 0, %s104
      %s126 = sphi 0, %s128
      %s129 = sphi 0, %s126
      %s130 = sphi 0, %s129
      %s146 = sphi 0, %s130
    $region4: #{tpu_custom_call.1} parent=1 // loop_header_branch
      %16 = sbr.rel (%p14) target = $region8
    $region5: #{tpu_custom_call.1} parent=1 // loop_body
      %s18 = ssub.s32 %s13, 1
      %s19 = ssub.s32 %s13, 2
      %s26 = sadd.s32 1, %s21
      %p27 = scmp.ge.s32.totalorder %s26, 2
      %s28 = scalar_select %p27, 0, %s26
      %s29 = sadd.s32 1, %s20
      %s30 = scalar_select %p27, %s29, %s20
      %p31 = scmp.ge.s32.totalorder %s30, 2
      %s32 = scalar_select %p31, 0, %s30
      %s33 = ssub.s32 %s20, %s32
      %p34 = scmp.eq.s32.totalorder %s33, 0
      %s36 = sadd.s32 %s35, 1
      %s37 = scalar_select %p34, %s35, %s36
      %p40 = pneg %p34
      %p41 = scmp.eq.s32.totalorder %s13, 3
      %p42 = por %p40, %p41
      %p43 = scmp.ne.s32.totalorder %s35, %s38
      %p44 = scmp.eq.s32.totalorder %s13, 0
      %p45 = por %p43, %p44
      %p46 = scmp.ne.s32.totalorder %s35, %s38
      %p47 = scmp.eq.s32.totalorder %s18, 3
      %p48 = por %p46, %p47
      %p49 = scmp.ne.s32.totalorder %s38, %s39
      %p50 = scmp.eq.s32.totalorder %s18, 0
      %p51 = por %p49, %p50
      %p52 = scmp.ne.s32.totalorder %s38, %s39
      %p53 = scmp.eq.s32.totalorder %s19, 3
      %p54 = por %p52, %p53
      %p56 = scmp.ne.s32.totalorder %s39, %s55
      %p57 = scmp.eq.s32.totalorder %s19, 0
      %p58 = por %p56, %p57
      %s60 = sadd.s32 %s59, 1
      %p63 = scmp.eq.s32.totalorder %s13, 3
      %p64 = scmp.ne.s32.totalorder %s59, %s61
      %p65 = scmp.eq.s32.totalorder %s13, 0
      %p66 = por %p64, %p65
      %p67 = scmp.ne.s32.totalorder %s59, %s61
      %p68 = scmp.eq.s32.totalorder %s18, 3
      %p69 = por %p67, %p68
      %p70 = scmp.ne.s32.totalorder %s61, %s62
      %p71 = scmp.eq.s32.totalorder %s18, 0
      %p72 = por %p70, %p71
      %p73 = scmp.ne.s32.totalorder %s61, %s62
      %p74 = scmp.eq.s32.totalorder %s19, 3
      %p75 = por %p73, %p74
      %p77 = scmp.ne.s32.totalorder %s62, %s76
      %p78 = scmp.eq.s32.totalorder %s19, 0
      %p79 = por %p77, %p78
      %s81 = sadd.s32 %s80, 1
      %p84 = scmp.eq.s32.totalorder %s13, 3
      %p85 = scmp.ne.s32.totalorder %s80, %s82
      %p86 = scmp.eq.s32.totalorder %s13, 0
      %p87 = por %p85, %p86
      %p88 = scmp.ne.s32.totalorder %s80, %s82
      %p89 = scmp.eq.s32.totalorder %s18, 3
      %p90 = por %p88, %p89
      %p91 = scmp.ne.s32.totalorder %s82, %s83
      %p92 = scmp.eq.s32.totalorder %s18, 0
      %p93 = por %p91, %p92
      %p94 = scmp.ne.s32.totalorder %s82, %s83
      %p95 = scmp.eq.s32.totalorder %s19, 3
      %p96 = por %p94, %p95
      %p98 = scmp.ne.s32.totalorder %s83, %s97
      %p99 = scmp.eq.s32.totalorder %s19, 0
      %p100 = por %p98, %p99
      %s102 = sadd.s32 %s101, 1
      %p105 = scmp.eq.s32.totalorder %s13, 3
      %p106 = scmp.ne.s32.totalorder %s101, %s103
      %p107 = scmp.eq.s32.totalorder %s13, 0
      %p108 = por %p106, %p107
      %p109 = scmp.ne.s32.totalorder %s101, %s103
      %p110 = scmp.eq.s32.totalorder %s18, 3
      %p111 = por %p109, %p110
      %p112 = scmp.ne.s32.totalorder %s103, %s104
      %p113 = scmp.eq.s32.totalorder %s18, 0
      %p114 = por %p112, %p113
      %p115 = scmp.ne.s32.totalorder %s103, %s104
      %p116 = scmp.eq.s32.totalorder %s19, 3
      %p117 = por %p115, %p116
      %p119 = scmp.ne.s32.totalorder %s104, %s118
      %p120 = scmp.eq.s32.totalorder %s19, 0
      %p121 = por %p119, %p120
      %s122 = ssub.s32 %s20, %s32
      %s123 = ssub.s32 %s21, %s28
      %s124 = sor.u32 %s122, %s123
      %p125 = scmp.eq.s32.totalorder %s124, 0
      %s127 = sadd.s32 %s126, 1
      %s128 = scalar_select %p125, %s126, %s127
      %p131 = pneg %p125
      %p132 = scmp.eq.s32.totalorder %s13, 3
      %p133 = por %p131, %p132
      %p134 = scmp.ne.s32.totalorder %s126, %s129
      %p135 = scmp.eq.s32.totalorder %s13, 0
      %p136 = por %p134, %p135
      %p137 = scmp.ne.s32.totalorder %s126, %s129
      %p138 = scmp.eq.s32.totalorder %s18, 3
      %p139 = por %p137, %p138
      %p140 = scmp.ne.s32.totalorder %s129, %s130
      %p141 = scmp.eq.s32.totalorder %s18, 0
      %p142 = por %p140, %p141
      %p143 = scmp.ne.s32.totalorder %s129, %s130
      %p144 = scmp.eq.s32.totalorder %s19, 3
      %p145 = por %p143, %p144
      %p147 = scmp.ne.s32.totalorder %s130, %s146
      %p148 = scmp.eq.s32.totalorder %s19, 0
      %p149 = por %p147, %p148
      %p150 = scmp.le.s32.totalorder 1, %s13
      %p151 = scmp.lt.s32.totalorder %s13, 5
      %p152 = pnand %p150, %p151
      %p153 = pneg %p152
      // Predicated region
      $region9: #{tpu_custom_call.1} parent=5 // pred_check
        _
      $region10: #{tpu_custom_call.1} parent=5 // pred_check_branch
        %155 = sbr.rel (%p152) target = $region12
      $region11: #{tpu_custom_call.1} parent=5 // pred_region
        %s156 = ssub.s32 %s13, 1
        // Predicated region
        $region13: #{tpu_custom_call.1} parent=11 // pred_check
          %p157 = pneg %p72
        $region14: #{tpu_custom_call.1} parent=11 // pred_check_branch
          %159 = sbr.rel (%p157) target = $region16
        $region15: #{tpu_custom_call.1} parent=11 // pred_region
          _
        $region16: #{tpu_custom_call.1} parent=11 // pred_fallthru
          _
        // Predicated region
        $region17: #{tpu_custom_call.1} parent=11 // pred_check
          %p160 = pneg %p93
        $region18: #{tpu_custom_call.1} parent=11 // pred_check_branch
          %162 = sbr.rel (%p160) target = $region20
        $region19: #{tpu_custom_call.1} parent=11 // pred_region
          _
        $region20: #{tpu_custom_call.1} parent=11 // pred_fallthru
          _
        // Predicated region
        $region21: #{tpu_custom_call.1} parent=11 // pred_check
          %p163 = pneg %p114
        $region22: #{tpu_custom_call.1} parent=11 // pred_check_branch
          %165 = sbr.rel (%p163) target = $region24
        $region23: #{tpu_custom_call.1} parent=11 // pred_region
          _
        $region24: #{tpu_custom_call.1} parent=11 // pred_fallthru
          _
      $region12: #{tpu_custom_call.1} parent=5 // pred_fallthru
        _
      %p166 = scmp.lt.s32.totalorder %s13, 4
      // Predicated region
      $region25: #{tpu_custom_call.1} parent=5 // pred_check
        %p167 = pneg %p166
      $region26: #{tpu_custom_call.1} parent=5 // pred_check_branch
        %169 = sbr.rel (%p167) target = $region28
      $region27: #{tpu_custom_call.1} parent=5 // pred_region
        // Predicated region
        $region29: #{tpu_custom_call.1} parent=27 // pred_check
          %p170 = pneg %p45
        $region30: #{tpu_custom_call.1} parent=27 // pred_check_branch
          %172 = sbr.rel (%p170) target = $region32
        $region31: #{tpu_custom_call.1} parent=27 // pred_region
          %p173 = scmp.lt.s32.totalorder %s20, 1
          %s174 = scalar_select %p173, %s20, 1
          %s175 = smul.addr %s174, 60
          %s176 = smul.addr %s175, 8
          %s177 = scalar_lea.vmem %s0, %s176
        $region32: #{tpu_custom_call.1} parent=27 // pred_fallthru
          _
      $region28: #{tpu_custom_call.1} parent=5 // pred_fallthru
        _
      %p178 = scmp.le.s32.totalorder 1, %s13
      %p179 = scmp.lt.s32.totalorder %s13, 5
      %p180 = pnand %p178, %p179
      %p181 = pneg %p180
      // Predicated region
      $region33: #{tpu_custom_call.1} parent=5 // pred_check
        _
      $region34: #{tpu_custom_call.1} parent=5 // pred_check_branch
        %183 = sbr.rel (%p180) target = $region36
      $region35: #{tpu_custom_call.1} parent=5 // pred_region
        %s184 = ssub.s32 %s13, 1
        %p185 = scmp.lt.s32.totalorder %s22, 1
        %s186 = scalar_select %p185, %s22, 1
        %s187 = smul.addr %s186, 60
        %s188 = smul.addr %s187, 8
        %s189 = scalar_lea.vmem %s0, %s188
        %p190 = pneg %p51
        %p191 = pneg %p48
        %p192 = pneg %p72
        %p193 = pneg %p69
        %p194 = pneg %p93
        %p195 = pneg %p90
        %p196 = pneg %p114
        %p197 = pneg %p111
        %p198 = pneg %p142
        %p199 = pneg %p139
        %s200 = sand.u32 %s129, 1
        %s201 = scalar_lea.sflag [#allocation3], %s200
        %s202 = sand.u32 %s129, 1
        %s203 = smul.addr %s202, 128
        %s204 = scalar_lea.vmem [#allocation2], %s203
        %p205 = scmp.lt.s32.totalorder %s22, 1
        %s206 = scalar_select %p205, %s22, 1
        %s207 = smul.addr %s206, 60
        %s208 = smul.addr %s207, 8
        %s209 = scalar_lea.vmem %s0, %s208
        %s210 = smul.u32 8, %s23
        %s212 = smul.u32 %s23, 8
        %s213 = smul.u32 %s212, 24
        %s214 = scalar_lea.vmem %s209, %s213
        %v215 = vld [vmem:[%s214] sm:$0xff]
        %v216 = vld [vmem:[%s214 + $0x8] sm:$0xff]
        %v217 = vld [vmem:[%s214 + $0x10] sm:$0xf]
        %v218 = vld [vmem:[%s214 + $0x18] sm:$0xff]
        %v219 = vld [vmem:[%s214 + $0x20] sm:$0xff]
        %v220 = vld [vmem:[%s214 + $0x28] sm:$0xf]
        %v221 = vld [vmem:[%s214 + $0x30] sm:$0xff]
        %v222 = vld [vmem:[%s214 + $0x38] sm:$0xff]
        %v223 = vld [vmem:[%s214 + $0x40] sm:$0xf]
        %v224 = vld [vmem:[%s214 + $0x48] sm:$0xff]
        %v225 = vld [vmem:[%s214 + $0x50] sm:$0xff]
        %v226 = vld [vmem:[%s214 + $0x58] sm:$0xf]
        %v227 = vld [vmem:[%s214 + $0x60] sm:$0xff]
        %v228 = vld [vmem:[%s214 + $0x68] sm:$0xff]
        %v229 = vld [vmem:[%s214 + $0x70] sm:$0xf]
        %v230 = vld [vmem:[%s214 + $0x78] sm:$0xff]
        %v231 = vld [vmem:[%s214 + $0x80] sm:$0xff]
        %v232 = vld [vmem:[%s214 + $0x88] sm:$0xf]
        %v233 = vld [vmem:[%s214 + $0x90] sm:$0xff]
        %v234 = vld [vmem:[%s214 + $0x98] sm:$0xff]
        %v235 = vld [vmem:[%s214 + $0xa0] sm:$0xf]
        %v236 = vld [vmem:[%s214 + $0xa8] sm:$0xff]
        %v237 = vld [vmem:[%s214 + $0xb0] sm:$0xff]
        %v238 = vld [vmem:[%s214 + $0xb8] sm:$0xf]
        %v239 = vld [vmem:[%s214 + $0xc0] sm:$0xff]
        %v240 = vld [vmem:[%s214 + $0xc8] sm:$0xff]
        %v241 = vld [vmem:[%s214 + $0xd0] sm:$0xf]
        %v242 = vld [vmem:[%s214 + $0xd8] sm:$0xff]
        %v243 = vld [vmem:[%s214 + $0xe0] sm:$0xff]
        %v244 = vld [vmem:[%s214 + $0xe8] sm:$0xf]
        %v245 = vld [vmem:[%s214 + $0xf0] sm:$0xff]
        %v246 = vld [vmem:[%s214 + $0xf8] sm:$0xff]
        %v247 = vld [vmem:[%s214 + $0x100] sm:$0xf]
        %v248 = vld [vmem:[%s214 + $0x108] sm:$0xff]
        %v249 = vld [vmem:[%s214 + $0x110] sm:$0xff]
        %v250 = vld [vmem:[%s214 + $0x118] sm:$0xf]
        %v251 = vmax.f32 %v215, 0.0
        %v252 = vmax.f32 %v216, 0.0
        %v253 = vmax.f32 %v217, 0.0
        %v254 = vmax.f32 %v218, 0.0
        %v255 = vmax.f32 %v219, 0.0
        %v256 = vmax.f32 %v220, 0.0
        %v257 = vmax.f32 %v221, 0.0
        %v258 = vmax.f32 %v222, 0.0
        %v259 = vmax.f32 %v223, 0.0
        %v260 = vmax.f32 %v224, 0.0
        %v261 = vmax.f32 %v225, 0.0
        %v262 = vmax.f32 %v226, 0.0
        %v263 = vmax.f32 %v227, 0.0
        %v264 = vmax.f32 %v228, 0.0
        %v265 = vmax.f32 %v229, 0.0
        %v266 = vmax.f32 %v230, 0.0
        %v267 = vmax.f32 %v231, 0.0
        %v268 = vmax.f32 %v232, 0.0
        %v269 = vmax.f32 %v233, 0.0
        %v270 = vmax.f32 %v234, 0.0
        %v271 = vmax.f32 %v235, 0.0
        %v272 = vmax.f32 %v236, 0.0
        %v273 = vmax.f32 %v237, 0.0
        %v274 = vmax.f32 %v238, 0.0
        %v275 = vmax.f32 %v239, 0.0
        %v276 = vmax.f32 %v240, 0.0
        %v277 = vmax.f32 %v241, 0.0
        %v278 = vmax.f32 %v242, 0.0
        %v279 = vmax.f32 %v243, 0.0
        %v280 = vmax.f32 %v244, 0.0
        %v281 = vmax.f32 %v245, 0.0
        %v282 = vmax.f32 %v246, 0.0
        %v283 = vmax.f32 %v247, 0.0
        %v284 = vmax.f32 %v248, 0.0
        %v285 = vmax.f32 %v249, 0.0
        %v286 = vmax.f32 %v250, 0.0
        %v287 = vld [vmem:[%s1] sm:$0x7]
        %v288 = vld [vmem:[%s1 + $0x4] sm:$0x7]
        %v289 = vld [vmem:[%s1 + $0x8] sm:$0x7]
        %v290 = vlaneseq
        %v291 = vshrl.u32 %v290, 7
        %v292 = vsub.s32 0, %v291
        %v293 = vrot.slane %v287, %v292
        %v294 = vmul.f32 %v251, %v293
        %v295 = vmul.f32 %v252, %v293
        %v296 = vmul.f32 %v254, %v293
        %v297 = vmul.f32 %v255, %v293
        %v298 = vmul.f32 %v257, %v293
        %v299 = vmul.f32 %v258, %v293
        %v300 = vmul.f32 %v260, %v293
        %v301 = vmul.f32 %v261, %v293
        %v302 = vmul.f32 %v263, %v293
        %v303 = vmul.f32 %v264, %v293
        %v304 = vmul.f32 %v266, %v293
        %v305 = vmul.f32 %v267, %v293
        %v306 = vmul.f32 %v269, %v293
        %v307 = vmul.f32 %v270, %v293
        %v308 = vmul.f32 %v272, %v293
        %v309 = vmul.f32 %v273, %v293
        %v310 = vadd.f32 %v294, 0.0
        %v311 = vadd.f32 %v295, 0.0
        %v312 = vadd.f32 %v296, 0.0
        %v313 = vadd.f32 %v297, 0.0
        %v314 = vadd.f32 %v298, 0.0
        %v315 = vadd.f32 %v299, 0.0
        %v316 = vadd.f32 %v300, 0.0
        %v317 = vadd.f32 %v301, 0.0
        %v318 = vadd.f32 %v302, 0.0
        %v319 = vadd.f32 %v303, 0.0
        %v320 = vadd.f32 %v304, 0.0
        %v321 = vadd.f32 %v305, 0.0
        %v322 = vadd.f32 %v306, 0.0
        %v323 = vadd.f32 %v307, 0.0
        %v324 = vadd.f32 %v308, 0.0
        %v325 = vadd.f32 %v309, 0.0
        %v326 = vlaneseq
        %v327 = vshrl.u32 %v326, 7
        %v328 = vsub.s32 1, %v327
        %v329 = vrot.slane %v287, %v328
        %v330 = vmul.f32 %v251, %v329
        %v331 = vmul.f32 %v252, %v329
        %v332 = vmul.f32 %v253, %v329
        %v333 = vmul.f32 %v254, %v329
        %v334 = vmul.f32 %v255, %v329
        %v335 = vmul.f32 %v256, %v329
        %v336 = vmul.f32 %v257, %v329
        %v337 = vmul.f32 %v258, %v329
        %v338 = vmul.f32 %v259, %v329
        %v339 = vmul.f32 %v260, %v329
        %v340 = vmul.f32 %v261, %v329
        %v341 = vmul.f32 %v262, %v329
        %v342 = vmul.f32 %v263, %v329
        %v343 = vmul.f32 %v264, %v329
        %v344 = vmul.f32 %v265, %v329
        %v345 = vmul.f32 %v266, %v329
        %v346 = vmul.f32 %v267, %v329
        %v347 = vmul.f32 %v268, %v329
        %v348 = vmul.f32 %v269, %v329
        %v349 = vmul.f32 %v270, %v329
        %v350 = vmul.f32 %v271, %v329
        %v351 = vmul.f32 %v272, %v329
        %v352 = vmul.f32 %v273, %v329
        %v353 = vmul.f32 %v274, %v329
        %vm378 = vcmask 1045504
        %v379 = vrot.slane %v330, 2
        %v380 = vrot.slane %v331, 2
        %v381 = vsel %vm378, %v379, %v380
        %v382 = vrot.slane %v332, 2
        %v383 = vsel %vm378, %v380, %v382
        %v384 = vrot.slane %v333, 2
        %v385 = vrot.slane %v334, 2
        %v386 = vsel %vm378, %v384, %v385
        %v387 = vrot.slane %v335, 2
        %v388 = vsel %vm378, %v385, %v387
        %v389 = vrot.slane %v336, 2
        %v390 = vrot.slane %v337, 2
        %v391 = vsel %vm378, %v389, %v390
        %v392 = vrot.slane %v338, 2
        %v393 = vsel %vm378, %v390, %v392
        %v394 = vrot.slane %v339, 2
        %v395 = vrot.slane %v340, 2
        %v396 = vsel %vm378, %v394, %v395
        %v397 = vrot.slane %v341, 2
        %v398 = vsel %vm378, %v395, %v397
        %v399 = vrot.slane %v342, 2
        %v400 = vrot.slane %v343, 2
        %v401 = vsel %vm378, %v399, %v400
        %v402 = vrot.slane %v344, 2
        %v403 = vsel %vm378, %v400, %v402
        %v404 = vrot.slane %v345, 2
        %v405 = vrot.slane %v346, 2
        %v406 = vsel %vm378, %v404, %v405
        %v407 = vrot.slane %v347, 2
        %v408 = vsel %vm378, %v405, %v407
        %v409 = vrot.slane %v348, 2
        %v410 = vrot.slane %v349, 2
        %v411 = vsel %vm378, %v409, %v410
        %v412 = vrot.slane %v350, 2
        %v413 = vsel %vm378, %v410, %v412
        %v414 = vrot.slane %v351, 2
        %v415 = vrot.slane %v352, 2
        %v416 = vsel %vm378, %v414, %v415
        %v417 = vrot.slane %v353, 2
        %v418 = vsel %vm378, %v415, %v417
        %v435 = vadd.f32 %v310, %v381
        %v436 = vadd.f32 %v311, %v383
        %v437 = vadd.f32 %v312, %v386
        %v438 = vadd.f32 %v313, %v388
        %v439 = vadd.f32 %v314, %v391
        %v440 = vadd.f32 %v315, %v393
        %v441 = vadd.f32 %v316, %v396
        %v442 = vadd.f32 %v317, %v398
        %v443 = vadd.f32 %v318, %v401
        %v444 = vadd.f32 %v319, %v403
        %v445 = vadd.f32 %v320, %v406
        %v446 = vadd.f32 %v321, %v408
        %v447 = vadd.f32 %v322, %v411
        %v448 = vadd.f32 %v323, %v413
        %v449 = vadd.f32 %v324, %v416
        %v450 = vadd.f32 %v325, %v418
        %v451 = vlaneseq
        %v452 = vshrl.u32 %v451, 7
        %v453 = vsub.s32 2, %v452
        %v454 = vrot.slane %v287, %v453
        %v455 = vmul.f32 %v251, %v454
        %v456 = vmul.f32 %v252, %v454
        %v457 = vmul.f32 %v253, %v454
        %v458 = vmul.f32 %v254, %v454
        %v459 = vmul.f32 %v255, %v454
        %v460 = vmul.f32 %v256, %v454
        %v461 = vmul.f32 %v257, %v454
        %v462 = vmul.f32 %v258, %v454
        %v463 = vmul.f32 %v259, %v454
        %v464 = vmul.f32 %v260, %v454
        %v465 = vmul.f32 %v261, %v454
        %v466 = vmul.f32 %v262, %v454
        %v467 = vmul.f32 %v263, %v454
        %v468 = vmul.f32 %v264, %v454
        %v469 = vmul.f32 %v265, %v454
        %v470 = vmul.f32 %v266, %v454
        %v471 = vmul.f32 %v267, %v454
        %v472 = vmul.f32 %v268, %v454
        %v473 = vmul.f32 %v269, %v454
        %v474 = vmul.f32 %v270, %v454
        %v475 = vmul.f32 %v271, %v454
        %v476 = vmul.f32 %v272, %v454
        %v477 = vmul.f32 %v273, %v454
        %v478 = vmul.f32 %v274, %v454
        %vm503 = vcmask 1043456
        %v504 = vrot.slane %v455, 4
        %v505 = vrot.slane %v456, 4
        %v506 = vsel %vm503, %v504, %v505
        %v507 = vrot.slane %v457, 4
        %v508 = vsel %vm503, %v505, %v507
        %v509 = vrot.slane %v458, 4
        %v510 = vrot.slane %v459, 4
        %v511 = vsel %vm503, %v509, %v510
        %v512 = vrot.slane %v460, 4
        %v513 = vsel %vm503, %v510, %v512
        %v514 = vrot.slane %v461, 4
        %v515 = vrot.slane %v462, 4
        %v516 = vsel %vm503, %v514, %v515
        %v517 = vrot.slane %v463, 4
        %v518 = vsel %vm503, %v515, %v517
        %v519 = vrot.slane %v464, 4
        %v520 = vrot.slane %v465, 4
        %v521 = vsel %vm503, %v519, %v520
        %v522 = vrot.slane %v466, 4
        %v523 = vsel %vm503, %v520, %v522
        %v524 = vrot.slane %v467, 4
        %v525 = vrot.slane %v468, 4
        %v526 = vsel %vm503, %v524, %v525
        %v527 = vrot.slane %v469, 4
        %v528 = vsel %vm503, %v525, %v527
        %v529 = vrot.slane %v470, 4
        %v530 = vrot.slane %v471, 4
        %v531 = vsel %vm503, %v529, %v530
        %v532 = vrot.slane %v472, 4
        %v533 = vsel %vm503, %v530, %v532
        %v534 = vrot.slane %v473, 4
        %v535 = vrot.slane %v474, 4
        %v536 = vsel %vm503, %v534, %v535
        %v537 = vrot.slane %v475, 4
        %v538 = vsel %vm503, %v535, %v537
        %v539 = vrot.slane %v476, 4
        %v540 = vrot.slane %v477, 4
        %v541 = vsel %vm503, %v539, %v540
        %v542 = vrot.slane %v478, 4
        %v543 = vsel %vm503, %v540, %v542
        %v560 = vadd.f32 %v435, %v506
        %v561 = vadd.f32 %v436, %v508
        %v562 = vadd.f32 %v437, %v511
        %v563 = vadd.f32 %v438, %v513
        %v564 = vadd.f32 %v439, %v516
        %v565 = vadd.f32 %v440, %v518
        %v566 = vadd.f32 %v441, %v521
        %v567 = vadd.f32 %v442, %v523
        %v568 = vadd.f32 %v443, %v526
        %v569 = vadd.f32 %v444, %v528
        %v570 = vadd.f32 %v445, %v531
        %v571 = vadd.f32 %v446, %v533
        %v572 = vadd.f32 %v447, %v536
        %v573 = vadd.f32 %v448, %v538
        %v574 = vadd.f32 %v449, %v541
        %v575 = vadd.f32 %v450, %v543
        %v576 = vlaneseq
        %v577 = vshrl.u32 %v576, 7
        %v578 = vsub.s32 0, %v577
        %v579 = vrot.slane %v288, %v578
        %v580 = vmul.f32 %v257, %v579
        %v581 = vmul.f32 %v258, %v579
        %v582 = vmul.f32 %v260, %v579
        %v583 = vmul.f32 %v261, %v579
        %v584 = vmul.f32 %v263, %v579
        %v585 = vmul.f32 %v264, %v579
        %v586 = vmul.f32 %v266, %v579
        %v587 = vmul.f32 %v267, %v579
        %v588 = vmul.f32 %v269, %v579
        %v589 = vmul.f32 %v270, %v579
        %v590 = vmul.f32 %v272, %v579
        %v591 = vmul.f32 %v273, %v579
        %v592 = vmul.f32 %v275, %v579
        %v593 = vmul.f32 %v276, %v579
        %v594 = vmul.f32 %v278, %v579
        %v595 = vmul.f32 %v279, %v579
        %v596 = vadd.f32 %v560, %v580
        %v597 = vadd.f32 %v561, %v581
        %v598 = vadd.f32 %v562, %v582
        %v599 = vadd.f32 %v563, %v583
        %v600 = vadd.f32 %v564, %v584
        %v601 = vadd.f32 %v565, %v585
        %v602 = vadd.f32 %v566, %v586
        %v603 = vadd.f32 %v567, %v587
        %v604 = vadd.f32 %v568, %v588
        %v605 = vadd.f32 %v569, %v589
        %v606 = vadd.f32 %v570, %v590
        %v607 = vadd.f32 %v571, %v591
        %v608 = vadd.f32 %v572, %v592
        %v609 = vadd.f32 %v573, %v593
        %v610 = vadd.f32 %v574, %v594
        %v611 = vadd.f32 %v575, %v595
        %v612 = vlaneseq
        %v613 = vshrl.u32 %v612, 7
        %v614 = vsub.s32 1, %v613
        %v615 = vrot.slane %v288, %v614
        %v616 = vmul.f32 %v257, %v615
        %v617 = vmul.f32 %v258, %v615
        %v618 = vmul.f32 %v259, %v615
        %v619 = vmul.f32 %v260, %v615
        %v620 = vmul.f32 %v261, %v615
        %v621 = vmul.f32 %v262, %v615
        %v622 = vmul.f32 %v263, %v615
        %v623 = vmul.f32 %v264, %v615
        %v624 = vmul.f32 %v265, %v615
        %v625 = vmul.f32 %v266, %v615
        %v626 = vmul.f32 %v267, %v615
        %v627 = vmul.f32 %v268, %v615
        %v628 = vmul.f32 %v269, %v615
        %v629 = vmul.f32 %v270, %v615
        %v630 = vmul.f32 %v271, %v615
        %v631 = vmul.f32 %v272, %v615
        %v632 = vmul.f32 %v273, %v615
        %v633 = vmul.f32 %v274, %v615
        %v634 = vmul.f32 %v275, %v615
        %v635 = vmul.f32 %v276, %v615
        %v636 = vmul.f32 %v277, %v615
        %v637 = vmul.f32 %v278, %v615
        %v638 = vmul.f32 %v279, %v615
        %v639 = vmul.f32 %v280, %v615
        %v664 = vrot.slane %v616, 2
        %v665 = vrot.slane %v617, 2
        %v666 = vsel %vm378, %v664, %v665
        %v667 = vrot.slane %v618, 2
        %v668 = vsel %vm378, %v665, %v667
        %v669 = vrot.slane %v619, 2
        %v670 = vrot.slane %v620, 2
        %v671 = vsel %vm378, %v669, %v670
        %v672 = vrot.slane %v621, 2
        %v673 = vsel %vm378, %v670, %v672
        %v674 = vrot.slane %v622, 2
        %v675 = vrot.slane %v623, 2
        %v676 = vsel %vm378, %v674, %v675
        %v677 = vrot.slane %v624, 2
        %v678 = vsel %vm378, %v675, %v677
        %v679 = vrot.slane %v625, 2
        %v680 = vrot.slane %v626, 2
        %v681 = vsel %vm378, %v679, %v680
        %v682 = vrot.slane %v627, 2
        %v683 = vsel %vm378, %v680, %v682
        %v684 = vrot.slane %v628, 2
        %v685 = vrot.slane %v629, 2
        %v686 = vsel %vm378, %v684, %v685
        %v687 = vrot.slane %v630, 2
        %v688 = vsel %vm378, %v685, %v687
        %v689 = vrot.slane %v631, 2
        %v690 = vrot.slane %v632, 2
        %v691 = vsel %vm378, %v689, %v690
        %v692 = vrot.slane %v633, 2
        %v693 = vsel %vm378, %v690, %v692
        %v694 = vrot.slane %v634, 2
        %v695 = vrot.slane %v635, 2
        %v696 = vsel %vm378, %v694, %v695
        %v697 = vrot.slane %v636, 2
        %v698 = vsel %vm378, %v695, %v697
        %v699 = vrot.slane %v637, 2
        %v700 = vrot.slane %v638, 2
        %v701 = vsel %vm378, %v699, %v700
        %v702 = vrot.slane %v639, 2
        %v703 = vsel %vm378, %v700, %v702
        %v720 = vadd.f32 %v596, %v666
        %v721 = vadd.f32 %v597, %v668
        %v722 = vadd.f32 %v598, %v671
        %v723 = vadd.f32 %v599, %v673
        %v724 = vadd.f32 %v600, %v676
        %v725 = vadd.f32 %v601, %v678
        %v726 = vadd.f32 %v602, %v681
        %v727 = vadd.f32 %v603, %v683
        %v728 = vadd.f32 %v604, %v686
        %v729 = vadd.f32 %v605, %v688
        %v730 = vadd.f32 %v606, %v691
        %v731 = vadd.f32 %v607, %v693
        %v732 = vadd.f32 %v608, %v696
        %v733 = vadd.f32 %v609, %v698
        %v734 = vadd.f32 %v610, %v701
        %v735 = vadd.f32 %v611, %v703
        %v736 = vlaneseq
        %v737 = vshrl.u32 %v736, 7
        %v738 = vsub.s32 2, %v737
        %v739 = vrot.slane %v288, %v738
        %v740 = vmul.f32 %v257, %v739
        %v741 = vmul.f32 %v258, %v739
        %v742 = vmul.f32 %v259, %v739
        %v743 = vmul.f32 %v260, %v739
        %v744 = vmul.f32 %v261, %v739
        %v745 = vmul.f32 %v262, %v739
        %v746 = vmul.f32 %v263, %v739
        %v747 = vmul.f32 %v264, %v739
        %v748 = vmul.f32 %v265, %v739
        %v749 = vmul.f32 %v266, %v739
        %v750 = vmul.f32 %v267, %v739
        %v751 = vmul.f32 %v268, %v739
        %v752 = vmul.f32 %v269, %v739
        %v753 = vmul.f32 %v270, %v739
        %v754 = vmul.f32 %v271, %v739
        %v755 = vmul.f32 %v272, %v739
        %v756 = vmul.f32 %v273, %v739
        %v757 = vmul.f32 %v274, %v739
        %v758 = vmul.f32 %v275, %v739
        %v759 = vmul.f32 %v276, %v739
        %v760 = vmul.f32 %v277, %v739
        %v761 = vmul.f32 %v278, %v739
        %v762 = vmul.f32 %v279, %v739
        %v763 = vmul.f32 %v280, %v739
        %v788 = vrot.slane %v740, 4
        %v789 = vrot.slane %v741, 4
        %v790 = vsel %vm503, %v788, %v789
        %v791 = vrot.slane %v742, 4
        %v792 = vsel %vm503, %v789, %v791
        %v793 = vrot.slane %v743, 4
        %v794 = vrot.slane %v744, 4
        %v795 = vsel %vm503, %v793, %v794
        %v796 = vrot.slane %v745, 4
        %v797 = vsel %vm503, %v794, %v796
        %v798 = vrot.slane %v746, 4
        %v799 = vrot.slane %v747, 4
        %v800 = vsel %vm503, %v798, %v799
        %v801 = vrot.slane %v748, 4
        %v802 = vsel %vm503, %v799, %v801
        %v803 = vrot.slane %v749, 4
        %v804 = vrot.slane %v750, 4
        %v805 = vsel %vm503, %v803, %v804
        %v806 = vrot.slane %v751, 4
        %v807 = vsel %vm503, %v804, %v806
        %v808 = vrot.slane %v752, 4
        %v809 = vrot.slane %v753, 4
        %v810 = vsel %vm503, %v808, %v809
        %v811 = vrot.slane %v754, 4
        %v812 = vsel %vm503, %v809, %v811
        %v813 = vrot.slane %v755, 4
        %v814 = vrot.slane %v756, 4
        %v815 = vsel %vm503, %v813, %v814
        %v816 = vrot.slane %v757, 4
        %v817 = vsel %vm503, %v814, %v816
        %v818 = vrot.slane %v758, 4
        %v819 = vrot.slane %v759, 4
        %v820 = vsel %vm503, %v818, %v819
        %v821 = vrot.slane %v760, 4
        %v822 = vsel %vm503, %v819, %v821
        %v823 = vrot.slane %v761, 4
        %v824 = vrot.slane %v762, 4
        %v825 = vsel %vm503, %v823, %v824
        %v826 = vrot.slane %v763, 4
        %v827 = vsel %vm503, %v824, %v826
        %v844 = vadd.f32 %v720, %v790
        %v845 = vadd.f32 %v721, %v792
        %v846 = vadd.f32 %v722, %v795
        %v847 = vadd.f32 %v723, %v797
        %v848 = vadd.f32 %v724, %v800
        %v849 = vadd.f32 %v725, %v802
        %v850 = vadd.f32 %v726, %v805
        %v851 = vadd.f32 %v727, %v807
        %v852 = vadd.f32 %v728, %v810
        %v853 = vadd.f32 %v729, %v812
        %v854 = vadd.f32 %v730, %v815
        %v855 = vadd.f32 %v731, %v817
        %v856 = vadd.f32 %v732, %v820
        %v857 = vadd.f32 %v733, %v822
        %v858 = vadd.f32 %v734, %v825
        %v859 = vadd.f32 %v735, %v827
        %v860 = vlaneseq
        %v861 = vshrl.u32 %v860, 7
        %v862 = vsub.s32 0, %v861
        %v863 = vrot.slane %v289, %v862
        %v864 = vmul.f32 %v263, %v863
        %v865 = vmul.f32 %v264, %v863
        %v866 = vmul.f32 %v266, %v863
        %v867 = vmul.f32 %v267, %v863
        %v868 = vmul.f32 %v269, %v863
        %v869 = vmul.f32 %v270, %v863
        %v870 = vmul.f32 %v272, %v863
        %v871 = vmul.f32 %v273, %v863
        %v872 = vmul.f32 %v275, %v863
        %v873 = vmul.f32 %v276, %v863
        %v874 = vmul.f32 %v278, %v863
        %v875 = vmul.f32 %v279, %v863
        %v876 = vmul.f32 %v281, %v863
        %v877 = vmul.f32 %v282, %v863
        %v878 = vmul.f32 %v284, %v863
        %v879 = vmul.f32 %v285, %v863
        %v880 = vadd.f32 %v844, %v864
        %v881 = vadd.f32 %v845, %v865
        %v882 = vadd.f32 %v846, %v866
        %v883 = vadd.f32 %v847, %v867
        %v884 = vadd.f32 %v848, %v868
        %v885 = vadd.f32 %v849, %v869
        %v886 = vadd.f32 %v850, %v870
        %v887 = vadd.f32 %v851, %v871
        %v888 = vadd.f32 %v852, %v872
        %v889 = vadd.f32 %v853, %v873
        %v890 = vadd.f32 %v854, %v874
        %v891 = vadd.f32 %v855, %v875
        %v892 = vadd.f32 %v856, %v876
        %v893 = vadd.f32 %v857, %v877
        %v894 = vadd.f32 %v858, %v878
        %v895 = vadd.f32 %v859, %v879
        %v896 = vlaneseq
        %v897 = vshrl.u32 %v896, 7
        %v898 = vsub.s32 1, %v897
        %v899 = vrot.slane %v289, %v898
        %v900 = vmul.f32 %v263, %v899
        %v901 = vmul.f32 %v264, %v899
        %v902 = vmul.f32 %v265, %v899
        %v903 = vmul.f32 %v266, %v899
        %v904 = vmul.f32 %v267, %v899
        %v905 = vmul.f32 %v268, %v899
        %v906 = vmul.f32 %v269, %v899
        %v907 = vmul.f32 %v270, %v899
        %v908 = vmul.f32 %v271, %v899
        %v909 = vmul.f32 %v272, %v899
        %v910 = vmul.f32 %v273, %v899
        %v911 = vmul.f32 %v274, %v899
        %v912 = vmul.f32 %v275, %v899
        %v913 = vmul.f32 %v276, %v899
        %v914 = vmul.f32 %v277, %v899
        %v915 = vmul.f32 %v278, %v899
        %v916 = vmul.f32 %v279, %v899
        %v917 = vmul.f32 %v280, %v899
        %v918 = vmul.f32 %v281, %v899
        %v919 = vmul.f32 %v282, %v899
        %v920 = vmul.f32 %v283, %v899
        %v921 = vmul.f32 %v284, %v899
        %v922 = vmul.f32 %v285, %v899
        %v923 = vmul.f32 %v286, %v899
        %v948 = vrot.slane %v900, 2
        %v949 = vrot.slane %v901, 2
        %v950 = vsel %vm378, %v948, %v949
        %v951 = vrot.slane %v902, 2
        %v952 = vsel %vm378, %v949, %v951
        %v953 = vrot.slane %v903, 2
        %v954 = vrot.slane %v904, 2
        %v955 = vsel %vm378, %v953, %v954
        %v956 = vrot.slane %v905, 2
        %v957 = vsel %vm378, %v954, %v956
        %v958 = vrot.slane %v906, 2
        %v959 = vrot.slane %v907, 2
        %v960 = vsel %vm378, %v958, %v959
        %v961 = vrot.slane %v908, 2
        %v962 = vsel %vm378, %v959, %v961
        %v963 = vrot.slane %v909, 2
        %v964 = vrot.slane %v910, 2
        %v965 = vsel %vm378, %v963, %v964
        %v966 = vrot.slane %v911, 2
        %v967 = vsel %vm378, %v964, %v966
        %v968 = vrot.slane %v912, 2
        %v969 = vrot.slane %v913, 2
        %v970 = vsel %vm378, %v968, %v969
        %v971 = vrot.slane %v914, 2
        %v972 = vsel %vm378, %v969, %v971
        %v973 = vrot.slane %v915, 2
        %v974 = vrot.slane %v916, 2
        %v975 = vsel %vm378, %v973, %v974
        %v976 = vrot.slane %v917, 2
        %v977 = vsel %vm378, %v974, %v976
        %v978 = vrot.slane %v918, 2
        %v979 = vrot.slane %v919, 2
        %v980 = vsel %vm378, %v978, %v979
        %v981 = vrot.slane %v920, 2
        %v982 = vsel %vm378, %v979, %v981
        %v983 = vrot.slane %v921, 2
        %v984 = vrot.slane %v922, 2
        %v985 = vsel %vm378, %v983, %v984
        %v986 = vrot.slane %v923, 2
        %v987 = vsel %vm378, %v984, %v986
        %v1004 = vadd.f32 %v880, %v950
        %v1005 = vadd.f32 %v881, %v952
        %v1006 = vadd.f32 %v882, %v955
        %v1007 = vadd.f32 %v883, %v957
        %v1008 = vadd.f32 %v884, %v960
        %v1009 = vadd.f32 %v885, %v962
        %v1010 = vadd.f32 %v886, %v965
        %v1011 = vadd.f32 %v887, %v967
        %v1012 = vadd.f32 %v888, %v970
        %v1013 = vadd.f32 %v889, %v972
        %v1014 = vadd.f32 %v890, %v975
        %v1015 = vadd.f32 %v891, %v977
        %v1016 = vadd.f32 %v892, %v980
        %v1017 = vadd.f32 %v893, %v982
        %v1018 = vadd.f32 %v894, %v985
        %v1019 = vadd.f32 %v895, %v987
        %v1020 = vlaneseq
        %v1021 = vshrl.u32 %v1020, 7
        %v1022 = vsub.s32 2, %v1021
        %v1023 = vrot.slane %v289, %v1022
        %v1024 = vmul.f32 %v263, %v1023
        %v1025 = vmul.f32 %v264, %v1023
        %v1026 = vmul.f32 %v265, %v1023
        %v1027 = vmul.f32 %v266, %v1023
        %v1028 = vmul.f32 %v267, %v1023
        %v1029 = vmul.f32 %v268, %v1023
        %v1030 = vmul.f32 %v269, %v1023
        %v1031 = vmul.f32 %v270, %v1023
        %v1032 = vmul.f32 %v271, %v1023
        %v1033 = vmul.f32 %v272, %v1023
        %v1034 = vmul.f32 %v273, %v1023
        %v1035 = vmul.f32 %v274, %v1023
        %v1036 = vmul.f32 %v275, %v1023
        %v1037 = vmul.f32 %v276, %v1023
        %v1038 = vmul.f32 %v277, %v1023
        %v1039 = vmul.f32 %v278, %v1023
        %v1040 = vmul.f32 %v279, %v1023
        %v1041 = vmul.f32 %v280, %v1023
        %v1042 = vmul.f32 %v281, %v1023
        %v1043 = vmul.f32 %v282, %v1023
        %v1044 = vmul.f32 %v283, %v1023
        %v1045 = vmul.f32 %v284, %v1023
        %v1046 = vmul.f32 %v285, %v1023
        %v1047 = vmul.f32 %v286, %v1023
        %v1072 = vrot.slane %v1024, 4
        %v1073 = vrot.slane %v1025, 4
        %v1074 = vsel %vm503, %v1072, %v1073
        %v1075 = vrot.slane %v1026, 4
        %v1076 = vsel %vm503, %v1073, %v1075
        %v1077 = vrot.slane %v1027, 4
        %v1078 = vrot.slane %v1028, 4
        %v1079 = vsel %vm503, %v1077, %v1078
        %v1080 = vrot.slane %v1029, 4
        %v1081 = vsel %vm503, %v1078, %v1080
        %v1082 = vrot.slane %v1030, 4
        %v1083 = vrot.slane %v1031, 4
        %v1084 = vsel %vm503, %v1082, %v1083
        %v1085 = vrot.slane %v1032, 4
        %v1086 = vsel %vm503, %v1083, %v1085
        %v1087 = vrot.slane %v1033, 4
        %v1088 = vrot.slane %v1034, 4
        %v1089 = vsel %vm503, %v1087, %v1088
        %v1090 = vrot.slane %v1035, 4
        %v1091 = vsel %vm503, %v1088, %v1090
        %v1092 = vrot.slane %v1036, 4
        %v1093 = vrot.slane %v1037, 4
        %v1094 = vsel %vm503, %v1092, %v1093
        %v1095 = vrot.slane %v1038, 4
        %v1096 = vsel %vm503, %v1093, %v1095
        %v1097 = vrot.slane %v1039, 4
        %v1098 = vrot.slane %v1040, 4
        %v1099 = vsel %vm503, %v1097, %v1098
        %v1100 = vrot.slane %v1041, 4
        %v1101 = vsel %vm503, %v1098, %v1100
        %v1102 = vrot.slane %v1042, 4
        %v1103 = vrot.slane %v1043, 4
        %v1104 = vsel %vm503, %v1102, %v1103
        %v1105 = vrot.slane %v1044, 4
        %v1106 = vsel %vm503, %v1103, %v1105
        %v1107 = vrot.slane %v1045, 4
        %v1108 = vrot.slane %v1046, 4
        %v1109 = vsel %vm503, %v1107, %v1108
        %v1110 = vrot.slane %v1047, 4
        %v1111 = vsel %vm503, %v1108, %v1110
        %v1128 = vadd.f32 %v1004, %v1074
        %v1129 = vadd.f32 %v1005, %v1076
        %v1130 = vadd.f32 %v1006, %v1079
        %v1131 = vadd.f32 %v1007, %v1081
        %v1132 = vadd.f32 %v1008, %v1084
        %v1133 = vadd.f32 %v1009, %v1086
        %v1134 = vadd.f32 %v1010, %v1089
        %v1135 = vadd.f32 %v1011, %v1091
        %v1136 = vadd.f32 %v1012, %v1094
        %v1137 = vadd.f32 %v1013, %v1096
        %v1138 = vadd.f32 %v1014, %v1099
        %v1139 = vadd.f32 %v1015, %v1101
        %v1140 = vadd.f32 %v1016, %v1104
        %v1141 = vadd.f32 %v1017, %v1106
        %v1142 = vadd.f32 %v1018, %v1109
        %v1143 = vadd.f32 %v1019, %v1111
        %v1144 = vpack.c.bf16 %v1129, %v1128
        %v1145 = vpack.c.bf16 %v1131, %v1130
        %v1146 = vpack.c.bf16 %v1133, %v1132
        %v1147 = vpack.c.bf16 %v1135, %v1134
        %v1148 = vpack.c.bf16 %v1137, %v1136
        %v1149 = vpack.c.bf16 %v1139, %v1138
        %v1150 = vpack.c.bf16 %v1141, %v1140
        %v1151 = vpack.c.bf16 %v1143, %v1142
        %v1152 = vld [vmem:[%s2] sm:$0xf]
        %v1153 = vld [vmem:[%s2 + $0x4] sm:$0xf]
        %v1154 = vld [vmem:[%s2 + $0x8] sm:$0xf]
        %v1155 = vld [vmem:[%s2 + $0xc] sm:$0xf]
        %v1156 = vld [vmem:[%s2 + $0x10] sm:$0xf]
        %v1157 = vld [vmem:[%s2 + $0x14] sm:$0xf]
        %v1158 = vld [vmem:[%s2 + $0x18] sm:$0xf]
        %v1159 = vld [vmem:[%s2 + $0x1c] sm:$0xf]
        %v1160 = vld [vmem:[%s3] sm:$0x1]
        %v1162 = vlaneseq
        %v1163 = vshrl.u32 %v1162, 7
        %v1164 = vsub.s32 0, %v1163
        %v1165 = vrot.slane %v1160, %v1164
        %v1175 = vunpack.c.l.b16 %v1152
        %v1176 = vunpack.c.l.b16 %v1153
        %v1177 = vunpack.c.l.b16 %v1154
        %v1178 = vunpack.c.l.b16 %v1155
        %v1179 = vunpack.c.l.b16 %v1156
        %v1180 = vunpack.c.l.b16 %v1157
        %v1181 = vunpack.c.l.b16 %v1158
        %v1182 = vunpack.c.l.b16 %v1159
        %v1183 = vpack.c.b16 %v1176, %v1175
        %v1184 = vpack.c.b16 %v1178, %v1177
        %v1185 = vpack.c.b16 %v1180, %v1179
        %v1186 = vpack.c.b16 %v1182, %v1181
        %vm1191 = vcmask 523264
        %v1193 = vsel %vm1191, %v1144, 0
        %v1196 = vsel %vm1191, %v1145, 0
        %v1199 = vsel %vm1191, %v1146, 0
        %v1202 = vsel %vm1191, %v1147, 0
        %v1205 = vsel %vm1191, %v1148, 0
        %v1208 = vsel %vm1191, %v1149, 0
        %v1211 = vsel %vm1191, %v1150, 0
        %v1214 = vsel %vm1191, %v1151, 0
        %1216 = vmatprep.subr.bf16.mxu0 0
        %1217 = vmatpush1.bf16.msra.mxu0 %v1183
        %1218 = vmatprep.subr.bf16.mxu0 0
        %1219 = vmatpush1.bf16.msra.mxu0 %v1184
        %1220 = vmatprep.subr.bf16.mxu0 0
        %1221 = vmatpush1.bf16.msra.mxu0 %v1185
        %1222 = vmatprep.subr.bf16.mxu0 0
        %1223 = vmatpush1.bf16.msra.mxu0 %v1186
        %1224 = vmatprep.subr.bf16.mxu0 0
        %1225 = vmatpush1.bf16.msra.mxu0 0
        %1226 = vmatprep.subr.bf16.mxu0 0
        %1227 = vmatpush1.bf16.msra.mxu0 0
        %1228 = vmatprep.subr.bf16.mxu0 0
        %1229 = vmatpush1.bf16.msra.mxu0 0
        %1230 = vmatprep.subr.bf16.mxu0 0
        %1231 = vmatpush1.bf16.msra.mxu0 0
        %1232 = vmatprep.subr.bf16.mxu0 0
        %1233 = vmatpush1.bf16.msra.mxu0 0
        %1234 = vmatprep.subr.bf16.mxu0 0
        %1235 = vmatpush1.bf16.msra.mxu0 0
        %1236 = vmatprep.subr.bf16.mxu0 0
        %1237 = vmatpush1.bf16.msra.mxu0 0
        %1238 = vmatprep.subr.bf16.mxu0 0
        %1239 = vmatpush1.bf16.msra.mxu0 0
        %1240 = vmatprep.subr.bf16.mxu0 0
        %1241 = vmatpush1.bf16.msra.mxu0 0
        %1242 = vmatprep.subr.bf16.mxu0 0
        %1243 = vmatpush1.bf16.msra.mxu0 0
        %1244 = vmatprep.subr.bf16.mxu0 0
        %1245 = vmatpush1.bf16.msra.mxu0 0
        %1246 = vmatprep.subr.bf16.mxu0 0
        %1247 = vmatpush1.bf16.msra.mxu0 0
        %1248 = vmatprep.mubr.bf16.mxu0 0
        %1249 = vmatmul.mubr.bf16.gmra.mrb[0].mxu0 %v1193
        %v1250 = vpop.f32.mrb[0].mxu0
        %v1251 = vadd.f32 %v1165, %v1250
        %v1252 = vpop.f32.mrb[0].mxu0
        %v1253 = vpop.f32.mrb[0].mxu0
        %v1254 = vadd.f32 %v1165, %v1253
        %v1255 = vpop.f32.mrb[0].mxu0
        %1256 = vmatprep.mubr.bf16.mxu0 0
        %1257 = vmatmul.mubr.bf16.gmra.mrb[0].mxu0 %v1196
        %v1258 = vpop.f32.mrb[0].mxu0
        %v1259 = vadd.f32 %v1165, %v1258
        %v1260 = vpop.f32.mrb[0].mxu0
        %v1261 = vpop.f32.mrb[0].mxu0
        %v1262 = vadd.f32 %v1165, %v1261
        %v1263 = vpop.f32.mrb[0].mxu0
        %1264 = vmatprep.mubr.bf16.mxu0 0
        %1265 = vmatmul.mubr.bf16.gmra.mrb[0].mxu0 %v1199
        %v1266 = vpop.f32.mrb[0].mxu0
        %v1267 = vadd.f32 %v1165, %v1266
        %v1268 = vpop.f32.mrb[0].mxu0
        %v1269 = vpop.f32.mrb[0].mxu0
        %v1270 = vadd.f32 %v1165, %v1269
        %v1271 = vpop.f32.mrb[0].mxu0
        %1272 = vmatprep.mubr.bf16.mxu0 0
        %1273 = vmatmul.mubr.bf16.gmra.mrb[0].mxu0 %v1202
        %v1274 = vpop.f32.mrb[0].mxu0
        %v1275 = vadd.f32 %v1165, %v1274
        %v1276 = vpop.f32.mrb[0].mxu0
        %v1277 = vpop.f32.mrb[0].mxu0
        %v1278 = vadd.f32 %v1165, %v1277
        %v1279 = vpop.f32.mrb[0].mxu0
        %1280 = vmatprep.mubr.bf16.mxu0 0
        %1281 = vmatmul.mubr.bf16.gmra.mrb[0].mxu0 %v1205
        %v1282 = vpop.f32.mrb[0].mxu0
        %v1283 = vadd.f32 %v1165, %v1282
        %v1284 = vpop.f32.mrb[0].mxu0
        %v1285 = vpop.f32.mrb[0].mxu0
        %v1286 = vadd.f32 %v1165, %v1285
        %v1287 = vpop.f32.mrb[0].mxu0
        %1288 = vmatprep.mubr.bf16.mxu0 0
        %1289 = vmatmul.mubr.bf16.gmra.mrb[0].mxu0 %v1208
        %v1290 = vpop.f32.mrb[0].mxu0
        %v1291 = vadd.f32 %v1165, %v1290
        %v1292 = vpop.f32.mrb[0].mxu0
        %v1293 = vpop.f32.mrb[0].mxu0
        %v1294 = vadd.f32 %v1165, %v1293
        %v1295 = vpop.f32.mrb[0].mxu0
        %1296 = vmatprep.mubr.bf16.mxu0 0
        %1297 = vmatmul.mubr.bf16.gmra.mrb[0].mxu0 %v1211
        %v1298 = vpop.f32.mrb[0].mxu0
        %v1299 = vadd.f32 %v1165, %v1298
        %v1300 = vpop.f32.mrb[0].mxu0
        %v1301 = vpop.f32.mrb[0].mxu0
        %v1302 = vadd.f32 %v1165, %v1301
        %v1303 = vpop.f32.mrb[0].mxu0
        %1304 = vmatprep.mubr.bf16.mxu0 0
        %1305 = vmatmul.mubr.bf16.gmra.mrb[0].mxu0 %v1214
        %v1306 = vpop.f32.mrb[0].mxu0
        %v1307 = vadd.f32 %v1165, %v1306
        %v1308 = vpop.f32.mrb[0].mxu0
        %v1309 = vpop.f32.mrb[0].mxu0
        %v1310 = vadd.f32 %v1165, %v1309
        %v1311 = vpop.f32.mrb[0].mxu0
        %1312 = vdwg.mxu0
        %1313 = vst [vmem:[%s204] sm:$0xff] %v1251
        %1314 = vst [vmem:[%s204 + $0x8] sm:$0xff] %v1254
        %1315 = vst [vmem:[%s204 + $0x10] sm:$0xff] %v1259
        %1316 = vst [vmem:[%s204 + $0x18] sm:$0xff] %v1262
        %1317 = vst [vmem:[%s204 + $0x20] sm:$0xff] %v1267
        %1318 = vst [vmem:[%s204 + $0x28] sm:$0xff] %v1270
        %1319 = vst [vmem:[%s204 + $0x30] sm:$0xff] %v1275
        %1320 = vst [vmem:[%s204 + $0x38] sm:$0xff] %v1278
        %1321 = vst [vmem:[%s204 + $0x40] sm:$0xff] %v1283
        %1322 = vst [vmem:[%s204 + $0x48] sm:$0xff] %v1286
        %1323 = vst [vmem:[%s204 + $0x50] sm:$0xff] %v1291
        %1324 = vst [vmem:[%s204 + $0x58] sm:$0xff] %v1294
        %1325 = vst [vmem:[%s204 + $0x60] sm:$0xff] %v1299
        %1326 = vst [vmem:[%s204 + $0x68] sm:$0xff] %v1302
        %1327 = vst [vmem:[%s204 + $0x70] sm:$0xff] %v1307
        %1328 = vst [vmem:[%s204 + $0x78] sm:$0xff] %v1310
        %s1329 = sand.u32 %s129, 1
        %s1330 = scalar_lea.sflag [#allocation3], %s1329
        %s1331 = sand.u32 %s129, 1
        %s1332 = smul.addr %s1331, 128
        %s1333 = scalar_lea.vmem [#allocation2], %s1332
        // Predicated region
        $region37: #{tpu_custom_call.1} parent=35 // pred_check
          %p1334 = pneg %p139
        $region38: #{tpu_custom_call.1} parent=35 // pred_check_branch
          %1336 = sbr.rel (%p1334) target = $region40
        $region39: #{tpu_custom_call.1} parent=35 // pred_region
          %s1337 = smul.u32 8, %s23
          %s1339 = ssub.s32 2048, 2048
          %1340 = vsyncadd %s1330, %s1339
          %s1341 = smul.addr %s1337, 2
          %s1342 = smul.addr %s22, 32
          %s1343 = sadd.s32 %s1341, %s1342
          %s1344 = smul.addr %s1343, 128
          %s1345 = scalar_lea.hbm %s4, %s1344
          %s1346 = sshll.u32 %s1333, 4
          %s1347 = int_to_ptr.vmem [resolvable:$true] %s1346
          %1352 = dma.vmem_to_hbm [thread:$0]  %s1347, 2048, %s1345, %s1330, 128, 128, 8
        $region40: #{tpu_custom_call.1} parent=35 // pred_fallthru
          _
      $region36: #{tpu_custom_call.1} parent=5 // pred_fallthru
        _
      %p1353 = scmp.le.s32.totalorder 2, %s13
      // Predicated region
      $region41: #{tpu_custom_call.1} parent=5 // pred_check
        %p1354 = pneg %p1353
      $region42: #{tpu_custom_call.1} parent=5 // pred_check_branch
        %1356 = sbr.rel (%p1354) target = $region44
      $region43: #{tpu_custom_call.1} parent=5 // pred_region
        %s1357 = ssub.s32 %s13, 2
        // Predicated region
        $region45: #{tpu_custom_call.1} parent=43 // pred_check
          %p1358 = pneg %p145
        $region46: #{tpu_custom_call.1} parent=43 // pred_check_branch
          %1360 = sbr.rel (%p1358) target = $region48
        $region47: #{tpu_custom_call.1} parent=43 // pred_region
          %s1361 = sand.u32 %s130, 1
          %s1362 = scalar_lea.sflag [#allocation3], %s1361
          %s1363 = sand.u32 %s130, 1
          %s1364 = smul.addr %s1363, 128
          %s1365 = scalar_lea.vmem [#allocation2], %s1364
          %1366 = dma.done %s1362, 2048
        $region48: #{tpu_custom_call.1} parent=43 // pred_fallthru
          _
      $region44: #{tpu_custom_call.1} parent=5 // pred_fallthru
        _
    $region6: #{tpu_custom_call.1} parent=1 // loop_footer
      %s17 = sadd.s32 1, %s13
    $region7: #{tpu_custom_call.1} parent=1 // loop_footer_branch
      %12 = sbr.rel target = $region3
    $region8: #{tpu_custom_call.1} parent=1 // loop_exit
      _
    %1367 = vsyncpa [#allocation3], 1
    %s1368 = scalar_lea.sflag [#allocation3], 1
    %1369 = vsyncpa %s1368, 1

</llo_original>
